<compile_context>
chip_gen: v7x
topology: tpu7x:2x2x1
jax: 0.10.0
libtpu: 0.0.40
codegen_flags: <defaults>
</compile_context>

<pallas_src>
import functools

import jax
import jax.numpy as jnp
from jax.experimental import pallas as pl
from jax.experimental.pallas import tpu as pltpu

LANES = 128


def _make_mae_kernel(use_log: bool, rows: int, block_rows: int):
    """Kernel producing a (1, 1, 128) per-block partial sum of |lg - log1p(tg)|."""
    ragged = (rows % block_rows) != 0

    def kernel(lg_ref, tg_ref, out_ref):
        lg = lg_ref[...].astype(jnp.float32)
        tg = tg_ref[...].astype(jnp.float32)
        if use_log:
            tg = jnp.log1p(tg)
        diff = jnp.abs(lg - tg)

        if ragged:
            # Mask rows of the (possibly) overrunning last block: out-of-bounds
            # rows contain unspecified data (log1p could even produce NaN), so
            # select 0 before reducing.
            base = pl.program_id(0) * block_rows
            row = jax.lax.broadcasted_iota(jnp.int32, diff.shape, 0)
            diff = jnp.where(base + row < rows, diff, 0.0)

        # Per-lane partial sums (sublane reduce only); keep lanes dense.
        out_ref[...] = jnp.sum(diff, axis=0, keepdims=True).reshape(1, 1, LANES)

    return kernel


def mae_with_log(logits, target, use_log=True, block_rows=2048):
    """logits: (B, 1, H, W); target: (B, H, W) -> scalar MAE loss (float32)."""
    logits = jnp.squeeze(logits, axis=1)
    assert logits.shape == target.shape, (logits.shape, target.shape)

    n_elem = logits.size

    # Free reshapes (no HBM copy) — keep native dtype.
    lg_flat = logits.reshape(-1)
    tg_flat = target.reshape(-1)

    # Only if the element count is not lane-aligned, pad by <128 zeros so the
    # (rows, 128) reshape is valid.  Zero padding contributes |0 - log1p(0)|=0.
    if n_elem % LANES:
        pad = LANES - (n_elem % LANES)
        lg_flat = jnp.pad(lg_flat, (0, pad))
        tg_flat = jnp.pad(tg_flat, (0, pad))

    rows = lg_flat.size // LANES
    lg2d = lg_flat.reshape(rows, LANES)
    tg2d = tg_flat.reshape(rows, LANES)

    # Tile sizing: multiple of 8 sublanes; if everything fits in one block,
    # use the full extent (legal block shape, no masking needed).
    block_rows = max(8, (int(block_rows) // 8) * 8)
    if rows <= block_rows:
        block_rows = rows
    num_blocks = pl.cdiv(rows, block_rows)

    kernel = _make_mae_kernel(bool(use_log), rows, block_rows)

    partials = pl.pallas_call(
        kernel,
        out_shape=jax.ShapeDtypeStruct((num_blocks, 1, LANES), jnp.float32),
        grid_spec=pltpu.PrefetchScalarGridSpec(
            num_scalar_prefetch=0,
            grid=(num_blocks,),
            in_specs=[
                pl.BlockSpec((block_rows, LANES), lambda i: (i, 0)),
                pl.BlockSpec((block_rows, LANES), lambda i: (i, 0)),
            ],
            out_specs=pl.BlockSpec((1, 1, LANES), lambda i: (i, 0, 0)),
        ),
        compiler_params=pltpu.CompilerParams(
            dimension_semantics=("parallel",),
        ),
    )(lg2d, tg2d)

    return (jnp.sum(partials) / jnp.float32(n_elem)).astype(jnp.float32)


if __name__ == "__main__":
    key = jax.random.PRNGKey(0)
    k1, k2 = jax.random.split(key)

    B, H, W = 2, 16, 16
    logits = jax.random.normal(k1, (B, 1, H, W), dtype=jnp.float32)
    # target >= 0 (log1p well defined), matching a regression-on-counts setup.
    target = jax.random.uniform(k2, (B, H, W), dtype=jnp.float32,
                                minval=0.0, maxval=5.0)

    # use_log=True path
    loss = mae_with_log(logits, target, use_log=True)
    loss = jax.block_until_ready(loss)
    ref = jnp.mean(jnp.abs(jnp.squeeze(logits, axis=1) - jnp.log1p(target)))
    assert jnp.allclose(loss, ref, rtol=1e-5, atol=1e-5), (loss, ref)

    # use_log=False path (separate static kernel variant, no log1p)
    loss_nolog = mae_with_log(logits, target, use_log=False)
    loss_nolog = jax.block_until_ready(loss_nolog)
    ref_nolog = jnp.mean(jnp.abs(jnp.squeeze(logits, axis=1) - target))
    assert jnp.allclose(loss_nolog, ref_nolog, rtol=1e-5, atol=1e-5), (
        loss_nolog, ref_nolog)

    print("KERNEL_OK")
</pallas_src>

<mosaic_0001>
module attributes {stable_mosaic.version = 11 : i64} {
  func.func @kernel(%arg0: i32, %arg1: memref<4x128xf32, #tpu.memory_space<vmem>>, %arg2: memref<4x128xf32, #tpu.memory_space<vmem>>, %arg3: memref<1x1x128xf32, #tpu.memory_space<vmem>>) attributes {dimension_semantics = [#tpu.dimension_semantics<parallel>], iteration_bounds = array<i64: 1>, scalar_prefetch = 0 : i64, scratch_operands = 0 : i64, tpu.core_type = #tpu.core_type<tc>, window_params = [{transform_indices = @transform_0, window_bounds = array<i64: 4, 128>}, {transform_indices = @transform_1, window_bounds = array<i64: 4, 128>}, {transform_indices = @transform_2, window_bounds = array<i64: 1, 1, 128>}]} {
    %c0 = arith.constant 0 : index
    %c0_0 = arith.constant 0 : index
    %0 = vector.load %arg1[%c0, %c0_0] : memref<4x128xf32, #tpu.memory_space<vmem>>, vector<4x128xf32>
    %c0_1 = arith.constant 0 : index
    %c0_2 = arith.constant 0 : index
    %1 = vector.load %arg2[%c0_1, %c0_2] : memref<4x128xf32, #tpu.memory_space<vmem>>, vector<4x128xf32>
    %2 = math.log1p %1 : vector<4x128xf32>
    %3 = arith.subf %0, %2 : vector<4x128xf32>
    %4 = math.absf %3 : vector<4x128xf32>
    %cst = arith.constant dense<0.000000e+00> : vector<128xf32>
    %5 = vector.multi_reduction <add>, %4, %cst [0] : vector<4x128xf32> to vector<128xf32>
    %6 = vector.shape_cast %5 : vector<128xf32> to vector<1x128xf32>
    %7 = vector.shape_cast %6 : vector<1x128xf32> to vector<1x1x128xf32>
    %c0_3 = arith.constant 0 : index
    %c0_4 = arith.constant 0 : index
    %c0_5 = arith.constant 0 : index
    %8 = vector.load %arg3[%c0_3, %c0_4, %c0_5] : memref<1x1x128xf32, #tpu.memory_space<vmem>>, vector<1x1x128xf32>
    tpu.vector_store %arg3[%c0_3, %c0_4, %c0_5], %7 {strides = array<i32>} : memref<1x1x128xf32, #tpu.memory_space<vmem>>, vector<1x1x128xf32>,
    return
  }
  func.func @transform_0(%arg0: i32) -> (i32, i32) {
    %c0_i32 = arith.constant 0 : i32
    %c0_i32_0 = arith.constant 0 : i32
    return %arg0, %c0_i32 : i32, i32
  }
  func.func @transform_1(%arg0: i32) -> (i32, i32) {
    %c0_i32 = arith.constant 0 : i32
    %c0_i32_0 = arith.constant 0 : i32
    return %arg0, %c0_i32 : i32, i32
  }
  func.func @transform_2(%arg0: i32) -> (i32, i32, i32) {
    %c0_i32 = arith.constant 0 : i32
    %c0_i32_0 = arith.constant 0 : i32
    %c0_i32_1 = arith.constant 0 : i32
    return %arg0, %c0_i32, %c0_i32_0 : i32, i32, i32
  }
}

</mosaic_0001>

<llo_original>
// kernel: tpu_custom_call.1
$region0: #{tpu_custom_call.1}
  #allocation0 [shape = 'u32[]', space=smem, size = 0x4, offset = 0x4, fixed_abs, tag = 'smem constant byte address 0x4 - core index']
  #allocation1 [shape = 'u32[144,128]{1,0:T(1,128)}', space=vmem, size = 0x12000, scoped, tag = 'internal scratch']
  %s0 = inlined_call_operand.hbm [shape: f32[4,128], index: 0, kind: input, shape index: {}]
  %s1 = inlined_call_operand.hbm [shape: f32[4,128], index: 1, kind: input, shape index: {}]
  %s2 = inlined_call_operand.hbm [shape: f32[1,1,128], index: 2, kind: output, shape index: {}]
  %s3 = sld [smem:[#allocation0]]
  $region26: #{tpu_custom_call.1} parent=0
    _
  %s5 = ssub.s32 1, %s3
  %s6 = scalar_select 0, %s5, %s3
  $region1: #{tpu_custom_call.1} parent=0
    #allocation2 [shape = 'u8[2048]{0}', space=vmem, size = 0x800, scoped, tag = 'input window, operand 0, single buffered']
    #allocation3 [shape = 's32[1]{0}', space=sflag, size = 0x4, scoped, tag = 'scoped memory for tpu_custom_call.1']
    #allocation4 [shape = 's32[1]{0}', space=sflag, size = 0x4, scoped, tag = 'scoped memory for tpu_custom_call.1']
    #allocation5 [shape = 'u8[2048]{0}', space=vmem, size = 0x800, scoped, tag = 'input window, operand 1, single buffered']
    #allocation6 [shape = 's32[1]{0}', space=sflag, size = 0x4, scoped, tag = 'scoped memory for tpu_custom_call.1']
    #allocation7 [shape = 'u8[512]{0}', space=vmem, size = 0x400, scoped, tag = 'output window, operand 0, single buffered']
    %7 = vsyncpa [#allocation3], 0
    %8 = vsyncpa [#allocation6], 0
    %9 = vsyncpa [#allocation4], 0
    // Predicated region
    $region2: #{tpu_custom_call.1} parent=1 // pred_check
      _
    $region3: #{tpu_custom_call.1} parent=1 // pred_check_branch
      %11 = sbr.rel (0) target = $region5
    $region4: #{tpu_custom_call.1} parent=1 // pred_region
      %s13 = ssub.s32 64, 64
      %14 = vsyncadd [#allocation3], %s13
      %s16 = sshll.u32 [#allocation2], 4
      %s17 = int_to_ptr.vmem [resolvable:$true] %s16
      %19 = dma.hbm_to_vmem [thread:$0]  %s0, 64, %s17, [#allocation3]
    $region5: #{tpu_custom_call.1} parent=1 // pred_fallthru
      _
    // Predicated region
    $region6: #{tpu_custom_call.1} parent=1 // pred_check
      _
    $region7: #{tpu_custom_call.1} parent=1 // pred_check_branch
      %21 = sbr.rel (0) target = $region9
    $region8: #{tpu_custom_call.1} parent=1 // pred_region
      %s23 = ssub.s32 64, 64
      %24 = vsyncadd [#allocation6], %s23
      %s26 = sshll.u32 [#allocation5], 4
      %s27 = int_to_ptr.vmem [resolvable:$true] %s26
      %29 = dma.hbm_to_vmem [thread:$0]  %s1, 64, %s27, [#allocation6]
    $region9: #{tpu_custom_call.1} parent=1 // pred_fallthru
      _
    // Predicated region
    $region10: #{tpu_custom_call.1} parent=1 // pred_check
      _
    $region11: #{tpu_custom_call.1} parent=1 // pred_check_branch
      %31 = sbr.rel (0) target = $region13
    $region12: #{tpu_custom_call.1} parent=1 // pred_region
      %32 = dma.done [#allocation3], 64
    $region13: #{tpu_custom_call.1} parent=1 // pred_fallthru
      _
    // Predicated region
    $region14: #{tpu_custom_call.1} parent=1 // pred_check
      _
    $region15: #{tpu_custom_call.1} parent=1 // pred_check_branch
      %34 = sbr.rel (0) target = $region17
    $region16: #{tpu_custom_call.1} parent=1 // pred_region
      %35 = dma.done [#allocation6], 64
    $region17: #{tpu_custom_call.1} parent=1 // pred_fallthru
      _
    %v36 = vld [vmem:[#allocation2] sm:$0xf]
    %v37 = vld [vmem:[#allocation5] sm:$0xf]
    %v38 = vadd.f32 %v37, 1.0
    %v39 = vlog2.pop %v38
    %v40 = vmul.f32 %v39, 0.6931472
    %v41 = vmul.f32 -0.5, %v37
    %v42 = vadd.f32 %v41, 1.0
    %v43 = vmul.f32 %v42, %v37
    %v44 = vand.u32 2147483647, %v37
    %vm45 = vcmp.lt.f32.partialorder %v44, 0.0004427343
    %v46 = vsel %vm45, %v43, %v40
    %v47 = vsub.f32 %v36, %v46
    %v48 = vand.u32 2147483647, %v47
    %vm49 = vcmask 1043456
    %v50 = vsel %vm49, %v48, 0.0
    %v51 = vrot.slane %v50, 4
    %v52 = vadd.f32 %v50, %v51
    %v53 = vrot.slane %v52, 2
    %v54 = vadd.f32 %v52, %v53
    %v55 = vrot.slane %v54, 1
    %v56 = vadd.f32 %v54, %v55
    %57 = vst [vmem:[#allocation7] sm:$0x1] %v56
    // Predicated region
    $region18: #{tpu_custom_call.1} parent=1 // pred_check
      _
    $region19: #{tpu_custom_call.1} parent=1 // pred_check_branch
      %59 = sbr.rel (0) target = $region21
    $region20: #{tpu_custom_call.1} parent=1 // pred_region
      %s61 = ssub.s32 16, 16
      %62 = vsyncadd [#allocation4], %s61
      %s64 = sshll.u32 [#allocation7], 4
      %s65 = int_to_ptr.vmem [resolvable:$true] %s64
      %67 = dma.vmem_to_hbm [thread:$0]  %s65, 16, %s2, [#allocation4]
    $region21: #{tpu_custom_call.1} parent=1 // pred_fallthru
      _
    // Predicated region
    $region22: #{tpu_custom_call.1} parent=1 // pred_check
      _
    $region23: #{tpu_custom_call.1} parent=1 // pred_check_branch
      %69 = sbr.rel (0) target = $region25
    $region24: #{tpu_custom_call.1} parent=1 // pred_region
      %70 = dma.done [#allocation4], 16
    $region25: #{tpu_custom_call.1} parent=1 // pred_fallthru
      _
    %71 = vsyncpa [#allocation3], 1
    %72 = vsyncpa [#allocation6], 1
    %73 = vsyncpa [#allocation4], 1

</llo_original>
